<compile_context>
chip_gen: v7x
topology: tpu7x:2x2x1
jax: 0.10.0
libtpu: 0.0.40
codegen_flags: <defaults>
</compile_context>

<pallas_src>
import functools

import jax
import jax.numpy as jnp
from jax.experimental import pallas as pl
from jax.experimental.pallas import tpu as pltpu

LANE = 128      # TPU lane width (last dim of a vreg)
SUBLANE = 8     # f32 sublane count (second-to-last dim of a vreg)


def _round_up(x, m):
    return ((x + m - 1) // m) * m


def _sare_kernel(pred_ref, target_ref, out_ref, *, epsilon):
    """Elementwise sigmoid(|(pred - target) / (target + eps)|) on one tile."""
    pred = pred_ref[...].astype(jnp.float32)
    tgt = target_ref[...].astype(jnp.float32)
    err = (pred - tgt) / (tgt + epsilon)          # VPU sub/add + EUP recip
    out_ref[...] = jax.nn.sigmoid(jnp.abs(err)).astype(out_ref.dtype)


def sigmoid_absolute_relative_error_loss(pred, target, *, epsilon=1e-4,
                                         tile_rows=1024):
    """Pallas forward of SigmoidAbsoluteRelativeErrorLoss.

    Works for any (matching) pred/target shape: flattens to a lane-dense
    [rows, 128] slab in the input dtype, tiles rows over a 1-D parallel
    grid, and reshapes back.
    """
    assert pred.shape == target.shape, (pred.shape, target.shape)
    orig_shape = pred.shape
    orig_dtype = pred.dtype
    n = int(pred.size)

    p = jnp.ravel(pred)
    t = jnp.ravel(target)

    # Lane-dense layout: [rows, 128], rows padded to a multiple of the tile.
    rows = pl.cdiv(n, LANE)
    tr = min(int(tile_rows), _round_up(rows, SUBLANE))
    tr = max(_round_up(tr, SUBLANE), SUBLANE)
    rows_padded = _round_up(rows, tr)
    n_padded = rows_padded * LANE

    pad = n_padded - n
    if pad:
        # Pad target with 1.0 so the divide in the padded tail is benign;
        # the tail is sliced off after the kernel anyway.
        p = jnp.pad(p, (0, pad), constant_values=0)
        t = jnp.pad(t, (0, pad), constant_values=1)

    p2 = p.reshape(rows_padded, LANE)
    t2 = t.reshape(rows_padded, LANE)

    grid = (rows_padded // tr,)
    kernel = functools.partial(_sare_kernel, epsilon=float(epsilon))

    out2 = pl.pallas_call(
        kernel,
        out_shape=jax.ShapeDtypeStruct((rows_padded, LANE), orig_dtype),
        grid=grid,
        in_specs=[
            pl.BlockSpec((tr, LANE), lambda i: (i, 0)),
            pl.BlockSpec((tr, LANE), lambda i: (i, 0)),
        ],
        out_specs=pl.BlockSpec((tr, LANE), lambda i: (i, 0)),
        compiler_params=pltpu.CompilerParams(
            dimension_semantics=("parallel",)),
    )(p2, t2)

    return out2.reshape(-1)[:n].reshape(orig_shape)


def _reference(pred, target, epsilon=1e-4):
    """Pure-JAX replica of the PyTorch forward, for verification."""
    error = (pred - target) / (target + epsilon)
    return jax.nn.sigmoid(jnp.abs(error))


if __name__ == "__main__":
    # Small shape consistent with an image-style regression head:
    # batch=2, channels=4, spatial=16x16  ->  2048 elements (16 x 128 slab).
    B, C, H, W = 2, 4, 16, 16
    epsilon = 1e-4

    key = jax.random.PRNGKey(0)
    k1, k2 = jax.random.split(key)
    pred = jax.random.normal(k1, (B, C, H, W), dtype=jnp.float32)
    target = 2.0 * jax.random.normal(k2, (B, C, H, W), dtype=jnp.float32)

    out = sigmoid_absolute_relative_error_loss(pred, target, epsilon=epsilon)
    jax.block_until_ready(out)

    ref = _reference(pred, target, epsilon)
    assert out.shape == ref.shape, (out.shape, ref.shape)
    assert jnp.allclose(out, ref, rtol=1e-5, atol=1e-5), (
        float(jnp.max(jnp.abs(out - ref))))

    print("KERNEL_OK")
</pallas_src>

<mosaic_0001>
module attributes {stable_mosaic.version = 11 : i64} {
  func.func @_sare_kernel(%arg0: i32, %arg1: memref<16x128xf32, #tpu.memory_space<vmem>>, %arg2: memref<16x128xf32, #tpu.memory_space<vmem>>, %arg3: memref<16x128xf32, #tpu.memory_space<vmem>>) attributes {dimension_semantics = [#tpu.dimension_semantics<parallel>], iteration_bounds = array<i64: 1>, scalar_prefetch = 0 : i64, scratch_operands = 0 : i64, tpu.core_type = #tpu.core_type<tc>, window_params = [{transform_indices = @transform_0, window_bounds = array<i64: 16, 128>}, {transform_indices = @transform_1, window_bounds = array<i64: 16, 128>}, {transform_indices = @transform_2, window_bounds = array<i64: 16, 128>}]} {
    %c0 = arith.constant 0 : index
    %c0_0 = arith.constant 0 : index
    %0 = vector.load %arg1[%c0, %c0_0] : memref<16x128xf32, #tpu.memory_space<vmem>>, vector<16x128xf32>
    %c0_1 = arith.constant 0 : index
    %c0_2 = arith.constant 0 : index
    %1 = vector.load %arg2[%c0_1, %c0_2] : memref<16x128xf32, #tpu.memory_space<vmem>>, vector<16x128xf32>
    %2 = arith.subf %0, %1 : vector<16x128xf32>
    %cst = arith.constant 9.99999974E-5 : f32
    %3 = vector.broadcast %cst : f32 to vector<16x128xf32>
    %4 = arith.addf %1, %3 : vector<16x128xf32>
    %5 = arith.divf %2, %4 : vector<16x128xf32>
    %6 = math.absf %5 : vector<16x128xf32>
    %7 = arith.negf %6 : vector<16x128xf32>
    %8 = math.exp %7 : vector<16x128xf32>
    %cst_3 = arith.constant 1.000000e+00 : f32
    %9 = vector.broadcast %cst_3 : f32 to vector<16x128xf32>
    %10 = arith.addf %9, %8 : vector<16x128xf32>
    %11 = arith.divf %9, %10 : vector<16x128xf32>
    %c0_4 = arith.constant 0 : index
    %c0_5 = arith.constant 0 : index
    %12 = vector.load %arg3[%c0_4, %c0_5] : memref<16x128xf32, #tpu.memory_space<vmem>>, vector<16x128xf32>
    tpu.vector_store %arg3[%c0_4, %c0_5], %11 {strides = array<i32>} : memref<16x128xf32, #tpu.memory_space<vmem>>, vector<16x128xf32>,
    return
  }
  func.func @transform_0(%arg0: i32) -> (i32, i32) {
    %c0_i32 = arith.constant 0 : i32
    %c0_i32_0 = arith.constant 0 : i32
    return %arg0, %c0_i32 : i32, i32
  }
  func.func @transform_1(%arg0: i32) -> (i32, i32) {
    %c0_i32 = arith.constant 0 : i32
    %c0_i32_0 = arith.constant 0 : i32
    return %arg0, %c0_i32 : i32, i32
  }
  func.func @transform_2(%arg0: i32) -> (i32, i32) {
    %c0_i32 = arith.constant 0 : i32
    %c0_i32_0 = arith.constant 0 : i32
    return %arg0, %c0_i32 : i32, i32
  }
}

</mosaic_0001>

<llo_original>
// kernel: tpu_custom_call.1
$region0: #{tpu_custom_call.1}
  #allocation0 [shape = 'u32[]', space=smem, size = 0x4, offset = 0x4, fixed_abs, tag = 'smem constant byte address 0x4 - core index']
  #allocation1 [shape = 'u32[144,128]{1,0:T(1,128)}', space=vmem, size = 0x12000, scoped, tag = 'internal scratch']
  %s0 = inlined_call_operand.hbm [shape: f32[16,128], index: 0, kind: input, shape index: {}]
  %s1 = inlined_call_operand.hbm [shape: f32[16,128], index: 1, kind: input, shape index: {}]
  %s2 = inlined_call_operand.hbm [shape: f32[16,128], index: 2, kind: output, shape index: {}]
  %s3 = sld [smem:[#allocation0]]
  $region26: #{tpu_custom_call.1} parent=0
    _
  %s5 = ssub.s32 1, %s3
  %s6 = scalar_select 0, %s5, %s3
  $region1: #{tpu_custom_call.1} parent=0
    #allocation2 [shape = 'u8[8192]{0}', space=vmem, size = 0x2000, scoped, tag = 'input window, operand 0, single buffered']
    #allocation3 [shape = 's32[1]{0}', space=sflag, size = 0x4, scoped, tag = 'scoped memory for tpu_custom_call.1']
    #allocation4 [shape = 's32[1]{0}', space=sflag, size = 0x4, scoped, tag = 'scoped memory for tpu_custom_call.1']
    #allocation5 [shape = 'u8[8192]{0}', space=vmem, size = 0x2000, scoped, tag = 'input window, operand 1, single buffered']
    #allocation6 [shape = 's32[1]{0}', space=sflag, size = 0x4, scoped, tag = 'scoped memory for tpu_custom_call.1']
    #allocation7 [shape = 'u8[8192]{0}', space=vmem, size = 0x2000, scoped, tag = 'output window, operand 0, single buffered']
    %7 = vsyncpa [#allocation3], 0
    %8 = vsyncpa [#allocation6], 0
    %9 = vsyncpa [#allocation4], 0
    // Predicated region
    $region2: #{tpu_custom_call.1} parent=1 // pred_check
      _
    $region3: #{tpu_custom_call.1} parent=1 // pred_check_branch
      %11 = sbr.rel (0) target = $region5
    $region4: #{tpu_custom_call.1} parent=1 // pred_region
      %s13 = ssub.s32 256, 256
      %14 = vsyncadd [#allocation3], %s13
      %s15 = sshll.u32 [#allocation2], 4
      %s16 = int_to_ptr.vmem [resolvable:$true] %s15
      %21 = dma.hbm_to_vmem [thread:$0]  %s0, 256, %s16, [#allocation3], 128, 128, 8
    $region5: #{tpu_custom_call.1} parent=1 // pred_fallthru
      _
    // Predicated region
    $region6: #{tpu_custom_call.1} parent=1 // pred_check
      _
    $region7: #{tpu_custom_call.1} parent=1 // pred_check_branch
      %23 = sbr.rel (0) target = $region9
    $region8: #{tpu_custom_call.1} parent=1 // pred_region
      %s25 = ssub.s32 256, 256
      %26 = vsyncadd [#allocation6], %s25
      %s27 = sshll.u32 [#allocation5], 4
      %s28 = int_to_ptr.vmem [resolvable:$true] %s27
      %33 = dma.hbm_to_vmem [thread:$0]  %s1, 256, %s28, [#allocation6], 128, 128, 8
    $region9: #{tpu_custom_call.1} parent=1 // pred_fallthru
      _
    // Predicated region
    $region10: #{tpu_custom_call.1} parent=1 // pred_check
      _
    $region11: #{tpu_custom_call.1} parent=1 // pred_check_branch
      %35 = sbr.rel (0) target = $region13
    $region12: #{tpu_custom_call.1} parent=1 // pred_region
      %36 = dma.done [#allocation3], 256
    $region13: #{tpu_custom_call.1} parent=1 // pred_fallthru
      _
    // Predicated region
    $region14: #{tpu_custom_call.1} parent=1 // pred_check
      _
    $region15: #{tpu_custom_call.1} parent=1 // pred_check_branch
      %38 = sbr.rel (0) target = $region17
    $region16: #{tpu_custom_call.1} parent=1 // pred_region
      %39 = dma.done [#allocation6], 256
    $region17: #{tpu_custom_call.1} parent=1 // pred_fallthru
      _
    %v40 = vld [vmem:[#allocation2] sm:$0xff]
    %v41 = vld [vmem:[#allocation2 + $0x8] sm:$0xff]
    %v42 = vld [vmem:[#allocation5] sm:$0xff]
    %v43 = vld [vmem:[#allocation5 + $0x8] sm:$0xff]
    %v44 = vsub.f32 %v40, %v42
    %v45 = vsub.f32 %v41, %v43
    %v46 = vadd.f32 %v42, 0.0001
    %v47 = vadd.f32 %v43, 0.0001
    %v48 = vrcp.pop %v46
    %v49 = vmul.f32 %v44, %v48
    %v50 = vrcp.pop %v47
    %v51 = vmul.f32 %v45, %v50
    %v52 = vand.u32 2147483647, %v49
    %v53 = vand.u32 2147483647, %v51
    %v54 = vxor.u32 %v52, 2147483648
    %v55 = vxor.u32 %v53, 2147483648
    %v56 = vmul.f32 %v54, 1.442695
    %v57 = vpow.pop %v56
    %v58 = vmul.f32 %v55, 1.442695
    %v59 = vpow.pop %v58
    %v60 = vadd.f32 %v57, 1.0
    %v61 = vadd.f32 %v59, 1.0
    %v62 = vrcp.pop %v60
    %v63 = vmul.f32 1.0, %v62
    %v64 = vrcp.pop %v61
    %v65 = vmul.f32 1.0, %v64
    %66 = vst [vmem:[#allocation7] sm:$0xff] %v63
    %67 = vst [vmem:[#allocation7 + $0x8] sm:$0xff] %v65
    // Predicated region
    $region18: #{tpu_custom_call.1} parent=1 // pred_check
      _
    $region19: #{tpu_custom_call.1} parent=1 // pred_check_branch
      %69 = sbr.rel (0) target = $region21
    $region20: #{tpu_custom_call.1} parent=1 // pred_region
      %s71 = ssub.s32 256, 256
      %72 = vsyncadd [#allocation4], %s71
      %s73 = sshll.u32 [#allocation7], 4
      %s74 = int_to_ptr.vmem [resolvable:$true] %s73
      %79 = dma.vmem_to_hbm [thread:$0]  %s74, 256, %s2, [#allocation4], 128, 128, 8
    $region21: #{tpu_custom_call.1} parent=1 // pred_fallthru
      _
    // Predicated region
    $region22: #{tpu_custom_call.1} parent=1 // pred_check
      _
    $region23: #{tpu_custom_call.1} parent=1 // pred_check_branch
      %81 = sbr.rel (0) target = $region25
    $region24: #{tpu_custom_call.1} parent=1 // pred_region
      %82 = dma.done [#allocation4], 256
    $region25: #{tpu_custom_call.1} parent=1 // pred_fallthru
      _
    %83 = vsyncpa [#allocation3], 1
    %84 = vsyncpa [#allocation6], 1
    %85 = vsyncpa [#allocation4], 1

</llo_original>
